<compile_context>
chip_gen: v6e
topology: v6e:2x2x1
jax: 0.10.0
libtpu: 0.0.40
codegen_flags: <defaults>
</compile_context>

<pallas_src>
import functools

import jax
import jax.numpy as jnp
from jax import lax
from jax.experimental import pallas as pl
from jax.experimental.pallas import tpu as pltpu


def _round_up(x, m):
    return ((x + m - 1) // m) * m


def _largest_divisor_tile(total, unit, cap):
    """Largest multiple of `unit` that divides `total` and is <= cap (>= unit)."""
    best = unit
    for c in range(unit, min(cap, total) + 1, unit):
        if total % c == 0:
            best = c
    return best


def _vmem_budget_bytes():
    """~3/4 of physical per-core VMEM; conservative fallback works on v7x."""
    phys = None
    try:
        info = pltpu.get_tpu_info()
        phys = int(getattr(info, "vmem_capacity_bytes"))
    except Exception:
        phys = None
    if not phys or phys <= 0:
        phys = 64 * 1024 * 1024  # v7x per-TC physical VMEM (smallest of the three gens)
    return max(32 * 1024 * 1024, (phys * 3) // 4)


def logreg_kernel(x_ref, w_ref, b_ref, o_ref, *, tk, w_resident):
    # x_ref: (tb, tk)  f32 activation chunk (cast to bf16 in-kernel)
    # w_ref: (Vp, Lp)  bf16 resident weight  OR  (tk, Lp) streamed chunk
    # b_ref: (1, Lp)   f32 bias (lane-dense, zero-padded)
    # o_ref: (tb, Lp)  f32 output tile — also the K accumulator (block (i, 0)
    #                  is constant across the reduction axis).
    k = pl.program_id(1)

    @pl.when(k == 0)
    def _():
        o_ref[...] = jnp.broadcast_to(b_ref[...], o_ref.shape)

    x_bf = x_ref[...].astype(jnp.bfloat16)  # VPU cast; free under HBM-bound roofline

    if w_resident:
        start = pl.multiple_of(k * tk, tk)
        w_chunk = w_ref[pl.ds(start, tk), :]
    else:
        w_chunk = w_ref[...]

    # (tb, tk) @ (tk, Lp) -> (tb, Lp); plain (M,K)x(K,N) MXU operand, f32 acc.
    o_ref[...] += lax.dot_general(
        x_bf, w_chunk,
        dimension_numbers=(((1,), (0,)), ((), ())),
        preferred_element_type=jnp.float32,
    )


def logreg_emb_forward(x, weight, bias, *, tb=None, tk=None, weight_resident=None,
                       vmem_limit_bytes=None):
    """Forward of LogRegEmb.

    x:      (B, V)  float32 (bf16 also accepted)
    weight: (L, V)  float32   (PyTorch nn.Linear (out, in) layout)
    bias:   (L,)    float32
    returns (B, L)  float32
    """
    B, V = x.shape
    L, V2 = weight.shape
    assert V == V2, "weight in_features must match x features"

    budget = _vmem_budget_bytes() if vmem_limit_bytes is None else int(vmem_limit_bytes)

    # Lane-dense output: pad num_labels up to exactly one 128-lane group.
    Lp = _round_up(max(L, 1), 128)

    # Reduction tile tk: multiple of 128; prefer one that divides round_up(V,128)
    # so x needs no padding in the feature dim.
    if tk is None:
        Vp = _round_up(V, 128)
        tk = _largest_divisor_tile(Vp, 128, min(4096, Vp))
    else:
        tk = _round_up(tk, 128)
        Vp = _round_up(V, tk)

    # Weight residency decision (conservative: assume Pallas double-buffers it).
    w_buf_bytes_resident = 2 * Vp * Lp * 2          # bf16, 2 buffers
    if weight_resident is None:
        w_resident = w_buf_bytes_resident <= budget // 2
    else:
        w_resident = bool(weight_resident)
    w_buf_bytes = w_buf_bytes_resident if w_resident else 2 * tk * Lp * 2

    # Batch tile tb: multiple of 8, divides Bp, sized against the VMEM budget.
    Bp0 = _round_up(B, 8)
    if tb is None:
        bias_bytes = 2 * 8 * Lp * 4
        slack = 4 * 1024 * 1024
        per_row = 2 * tk * 4 + tk * 2 + 2 * Lp * 4   # x dbl-buf f32 + bf16 cast + out dbl-buf
        tb_cap = max(8, (budget - w_buf_bytes - bias_bytes - slack) // per_row)
        tb_cap = max(8, (tb_cap // 8) * 8)
        cap = min(tb_cap, 1024, Bp0)
        if Bp0 >= 16:                 # leave >=2 batch tiles so v7x's 2 TCs both get work
            cap = min(cap, Bp0 // 2)
        cap = max(8, cap)
        tb = _largest_divisor_tile(Bp0, 8, cap)
        Bp = Bp0
    else:
        tb = max(8, _round_up(tb, 8))
        Bp = _round_up(B, tb)

    # x: pass straight through when no ragged edge; pad only if needed.
    if (Bp != B) or (Vp != V):
        x_in = jnp.zeros((Bp, Vp), x.dtype).at[:B, :V].set(x)
    else:
        x_in = x

    # Weight: single materialization = transpose + zero-pad + bf16 cast.
    # (Vp, Lp) layout -> lane-dense (K, N) MXU operand, no in-kernel transpose.
    w_t = jnp.zeros((Vp, Lp), jnp.bfloat16).at[:V, :L].set(
        weight.astype(jnp.bfloat16).T)
    bp = jnp.zeros((1, Lp), jnp.float32).at[0, :L].set(bias.astype(jnp.float32))

    grid = (Bp // tb, Vp // tk)       # reduction axis last

    x_spec = pl.BlockSpec((tb, tk), lambda i, k: (i, k))
    if w_resident:
        w_spec = pl.BlockSpec((Vp, Lp), lambda i, k: (0, 0))      # DMA'd once, VMEM-resident
    else:
        w_spec = pl.BlockSpec((tk, Lp), lambda i, k: (k, 0))      # streamed fallback
    b_spec = pl.BlockSpec((1, Lp), lambda i, k: (0, 0))
    o_spec = pl.BlockSpec((tb, Lp), lambda i, k: (i, 0))

    n_batch_tiles = Bp // tb
    w_reads = 1 if w_resident else n_batch_tiles
    cost = pl.CostEstimate(
        flops=2 * Bp * Vp * Lp,
        transcendentals=0,
        bytes_accessed=(Bp * Vp * x_in.dtype.itemsize   # x read once
                        + w_reads * Vp * Lp * 2         # weight (re-)reads
                        + Lp * 4                        # bias
                        + Bp * Lp * 4),                 # output write
    )

    kernel = functools.partial(logreg_kernel, tk=tk, w_resident=w_resident)

    out = pl.pallas_call(
        kernel,
        out_shape=jax.ShapeDtypeStruct((Bp, Lp), jnp.float32),
        grid_spec=pltpu.PrefetchScalarGridSpec(
            num_scalar_prefetch=0,
            grid=grid,
            in_specs=[x_spec, w_spec, b_spec],
            out_specs=o_spec,
        ),
        compiler_params=pltpu.CompilerParams(
            dimension_semantics=("parallel", "arbitrary"),
            vmem_limit_bytes=int(budget),
        ),
        cost_estimate=cost,
    )(x_in, w_t, bp)

    return out[:B, :L]


if __name__ == "__main__":
    # Small shapes consistent with the module: a batch of averaged-embedding
    # vectors of size vocab_size projected to num_labels logits.
    batch = 8
    vocab_size = 256   # in_features of the linear layer
    num_labels = 4

    key = jax.random.PRNGKey(0)
    kx, kw, kb = jax.random.split(key, 3)

    # Deterministic init mimicking nn.Linear defaults: U(-1/sqrt(fan_in), +1/sqrt(fan_in))
    bound = 1.0 / (vocab_size ** 0.5)
    weight = jax.random.uniform(kw, (num_labels, vocab_size), jnp.float32, -bound, bound)
    bias = jax.random.uniform(kb, (num_labels,), jnp.float32, -bound, bound)
    x = jax.random.normal(kx, (batch, vocab_size), jnp.float32)

    # tk=128 -> 2 reduction steps, exercising the K-accumulation path.
    out_resident = jax.block_until_ready(logreg_emb_forward(x, weight, bias, tk=128))
    # Also exercise the streamed-weight fallback path.
    out_streamed = jax.block_until_ready(
        logreg_emb_forward(x, weight, bias, tk=128, weight_resident=False))

    assert out_resident.shape == (batch, num_labels)
    assert out_streamed.shape == (batch, num_labels)

    # Tight check vs a bf16-input / f32-accumulate reference (same numerics as
    # the in-kernel cast + MXU path); loose sanity check vs pure-f32 nn.Linear.
    x_bf = x.astype(jnp.bfloat16).astype(jnp.float32)
    w_bf = weight.astype(jnp.bfloat16).astype(jnp.float32)
    ref_bf16 = x_bf @ w_bf.T + bias
    ref_f32 = x @ weight.T + bias
    for out in (out_resident, out_streamed):
        assert jnp.allclose(out, ref_bf16, atol=1e-3, rtol=1e-3), "mismatch vs bf16 reference"
        assert jnp.allclose(out, ref_f32, atol=5e-2, rtol=5e-2), "mismatch vs f32 reference"

    print("KERNEL_OK")
</pallas_src>

<mosaic_0001>
module attributes {stable_mosaic.version = 11 : i64} {
  func.func @logreg_kernel(%arg0: i32, %arg1: i32, %arg2: memref<8x128xf32, #tpu.memory_space<vmem>>, %arg3: memref<256x128xbf16, #tpu.memory_space<vmem>>, %arg4: memref<1x128xf32, #tpu.memory_space<vmem>>, %arg5: memref<8x128xf32, #tpu.memory_space<vmem>>) attributes {dimension_semantics = [#tpu.dimension_semantics<parallel>, #tpu.dimension_semantics<arbitrary>], iteration_bounds = array<i64: 1, 2>, scalar_prefetch = 0 : i64, scratch_operands = 0 : i64, tpu.core_type = #tpu.core_type<tc>, window_params = [{transform_indices = @transform_0, window_bounds = array<i64: 8, 128>}, {pipeline_mode = #tpu.pipeline_mode<synchronous>, transform_indices = @transform_1, window_bounds = array<i64: 256, 128>}, {pipeline_mode = #tpu.pipeline_mode<synchronous>, transform_indices = @transform_2, window_bounds = array<i64: 1, 128>}, {transform_indices = @transform_3, window_bounds = array<i64: 8, 128>}]} {
    %c0_i32 = arith.constant 0 : i32
    %0 = arith.cmpi eq, %arg1, %c0_i32 : i32
    %1 = arith.extui %0 : i1 to i32
    %c0_i32_0 = arith.constant 0 : i32
    %2 = arith.cmpi ne, %1, %c0_i32_0 : i32
    scf.if %2 {
      %c0_7 = arith.constant 0 : index
      %c0_8 = arith.constant 0 : index
      %13 = vector.load %arg4[%c0_7, %c0_8] : memref<1x128xf32, #tpu.memory_space<vmem>>, vector<1x128xf32>
      %14 = vector.shape_cast %13 : vector<1x128xf32> to vector<1x128xf32>
      %15 = vector.broadcast %14 : vector<1x128xf32> to vector<8x128xf32>
      %c0_9 = arith.constant 0 : index
      %c0_10 = arith.constant 0 : index
      %16 = vector.load %arg5[%c0_9, %c0_10] : memref<8x128xf32, #tpu.memory_space<vmem>>, vector<8x128xf32>
      tpu.vector_store %arg5[%c0_9, %c0_10], %15 {strides = array<i32>} : memref<8x128xf32, #tpu.memory_space<vmem>>, vector<8x128xf32>,
    } else {
    }
    %c0 = arith.constant 0 : index
    %c0_1 = arith.constant 0 : index
    %3 = vector.load %arg2[%c0, %c0_1] : memref<8x128xf32, #tpu.memory_space<vmem>>, vector<8x128xf32>
    %4 = arith.truncf %3 : vector<8x128xf32> to vector<8x128xbf16>
    %c128_i32 = arith.constant 128 : i32
    %5 = arith.muli %arg1, %c128_i32 : i32
    %6 = tpu.assume_multiple %5, 128 : i32
    %7 = arith.index_cast %6 : i32 to index
    %c0_2 = arith.constant 0 : index
    %8 = vector.load %arg3[%7, %c0_2] : memref<256x128xbf16, #tpu.memory_space<vmem>>, vector<128x128xbf16>
    %c0_3 = arith.constant 0 : index
    %c0_4 = arith.constant 0 : index
    %9 = vector.load %arg5[%c0_3, %c0_4] : memref<8x128xf32, #tpu.memory_space<vmem>>, vector<8x128xf32>
    %cst = arith.constant dense<0.000000e+00> : vector<8x128xf32>
    %10 = tpu.matmul %4, %8, %cst {dimension_numbers = #tpu.dot_dimension_numbers<[1], [0], [0], [1], [0, 0, 1, 1], [], []>} : vector<8x128xbf16>, vector<128x128xbf16>, vector<8x128xf32> -> vector<8x128xf32>
    %11 = arith.addf %9, %10 : vector<8x128xf32>
    %c0_5 = arith.constant 0 : index
    %c0_6 = arith.constant 0 : index
    %12 = vector.load %arg5[%c0_5, %c0_6] : memref<8x128xf32, #tpu.memory_space<vmem>>, vector<8x128xf32>
    tpu.vector_store %arg5[%c0_5, %c0_6], %11 {strides = array<i32>} : memref<8x128xf32, #tpu.memory_space<vmem>>, vector<8x128xf32>,
    return
  }
  func.func @transform_0(%arg0: i32, %arg1: i32) -> (i32, i32) {
    %c0_i32 = arith.constant 0 : i32
    return %arg0, %arg1 : i32, i32
  }
  func.func @transform_1(%arg0: i32, %arg1: i32) -> (i32, i32) {
    %c0_i32 = arith.constant 0 : i32
    %c0_i32_0 = arith.constant 0 : i32
    %c0_i32_1 = arith.constant 0 : i32
    return %c0_i32, %c0_i32_0 : i32, i32
  }
  func.func @transform_2(%arg0: i32, %arg1: i32) -> (i32, i32) {
    %c0_i32 = arith.constant 0 : i32
    %c0_i32_0 = arith.constant 0 : i32
    %c0_i32_1 = arith.constant 0 : i32
    return %c0_i32, %c0_i32_0 : i32, i32
  }
  func.func @transform_3(%arg0: i32, %arg1: i32) -> (i32, i32) {
    %c0_i32 = arith.constant 0 : i32
    %c0_i32_0 = arith.constant 0 : i32
    return %arg0, %c0_i32 : i32, i32
  }
}

</mosaic_0001>

<llo_original>
// kernel: tpu_custom_call.1
$region0: #{tpu_custom_call.1}
  #allocation0 [shape = 'u32[]', space=smem, size = 0x4, offset = 0x4, fixed_abs, tag = 'smem constant byte address 0x4 - core index']
  #allocation1 [shape = 'u32[144,128]{1,0:T(1,128)}', space=vmem, size = 0x12000, scoped, tag = 'internal scratch']
  %s0 = inlined_call_operand.hbm [shape: f32[8,256], index: 0, kind: input, shape index: {}]
  %s1 = inlined_call_operand.hbm [shape: bf16[256,128], index: 1, kind: input, shape index: {}]
  %s2 = inlined_call_operand.vmem [shape: f32[1,128], index: 2, kind: input, shape index: {}]
  %s3 = inlined_call_operand.hbm [shape: f32[8,128], index: 3, kind: output, shape index: {}]
  %s4 = sld [smem:[#allocation0]]
  $region57: #{tpu_custom_call.1} parent=0
    _
  %s6 = ssub.s32 1, %s4
  %s7 = scalar_select 0, %s6, %s4
  $region1: #{tpu_custom_call.1} parent=0
    #allocation2 [shape = 'u8[8192]{0}', space=vmem, size = 0x2000, scoped, tag = 'input window, operand 0']
    #allocation3 [shape = 's32[2]{0}', space=sflag, size = 0x8, scoped, tag = 'scoped memory for tpu_custom_call.1']
    #allocation4 [shape = 's32[2]{0}', space=sflag, size = 0x8, scoped, tag = 'scoped memory for tpu_custom_call.1']
    #allocation5 [shape = 'u8[65536]{0}', space=vmem, size = 0x10000, scoped, tag = 'input window, operand 1, single buffered']
    #allocation6 [shape = 's32[1]{0}', space=sflag, size = 0x4, scoped, tag = 'scoped memory for tpu_custom_call.1']
    #allocation7 [shape = 'u8[4096]{0}', space=vmem, size = 0x1000, scoped, tag = 'output window, operand 0, single buffered']
    %8 = vsyncpa [#allocation3], 0
    %s9 = scalar_lea.sflag [#allocation3], 1
    %10 = vsyncpa %s9, 0
    %11 = vsyncpa [#allocation6], 0
    %12 = vsyncpa [#allocation4], 0
    loop: start=0, step=1, limit=4
    $region2: #{tpu_custom_call.1} parent=1 // loop_pre_header
      _
    $region3: #{tpu_custom_call.1} parent=1 // loop_header
      %s14 = sphi 0, %s18
      %p15 = scmp.ge.s32.totalorder %s14, 4
      %s21 = sphi 0, %s33
      %s22 = sphi 0, %s29
      %s23 = sphi 0, %s21
      %s24 = sphi 0, %s22
      %s25 = sphi 0, %s23
      %s26 = sphi 0, %s24
      %s38 = sphi 0, %s40
      %s41 = sphi 0, %s38
      %s42 = sphi 0, %s41
      %s58 = sphi 0, %s42
      %s62 = sphi 0, %s62
      %s64 = sphi 0, %s62
      %s65 = sphi 0, %s64
      %s79 = sphi 0, %s65
      %s83 = sphi 0, %s83
      %s85 = sphi 0, %s83
      %s86 = sphi 0, %s85
      %s100 = sphi 0, %s86
      %s106 = sphi 0, %s108
      %s109 = sphi 0, %s106
      %s110 = sphi 0, %s109
      %s126 = sphi 0, %s110
    $region4: #{tpu_custom_call.1} parent=1 // loop_header_branch
      %17 = sbr.rel (%p15) target = $region8
    $region5: #{tpu_custom_call.1} parent=1 // loop_body
      %s19 = ssub.s32 %s14, 1
      %s20 = ssub.s32 %s14, 2
      %s27 = sadd.s32 1, %s22
      %p28 = scmp.ge.s32.totalorder %s27, 2
      %s29 = scalar_select %p28, 0, %s27
      %s30 = sadd.s32 1, %s21
      %s31 = scalar_select %p28, %s30, %s21
      %p32 = scmp.ge.s32.totalorder %s31, 1
      %s33 = scalar_select %p32, 0, %s31
      %s34 = ssub.s32 %s21, %s33
      %s35 = ssub.s32 %s22, %s29
      %s36 = sor.u32 %s34, %s35
      %p37 = scmp.eq.s32.totalorder %s36, 0
      %s39 = sadd.s32 %s38, 1
      %s40 = scalar_select %p37, %s38, %s39
      %p43 = pneg %p37
      %p44 = scmp.eq.s32.totalorder %s14, 1
      %p45 = por %p43, %p44
      %p46 = scmp.ne.s32.totalorder %s38, %s41
      %p47 = scmp.eq.s32.totalorder %s14, 0
      %p48 = por %p46, %p47
      %p49 = scmp.ne.s32.totalorder %s38, %s41
      %p50 = scmp.eq.s32.totalorder %s19, 1
      %p51 = por %p49, %p50
      %p52 = scmp.ne.s32.totalorder %s41, %s42
      %p53 = scmp.eq.s32.totalorder %s19, 0
      %p54 = por %p52, %p53
      %p55 = scmp.ne.s32.totalorder %s41, %s42
      %p56 = scmp.eq.s32.totalorder %s20, 1
      %p57 = por %p55, %p56
      %p59 = scmp.ne.s32.totalorder %s42, %s58
      %p60 = scmp.eq.s32.totalorder %s20, 0
      %p61 = por %p59, %p60
      %s63 = sadd.s32 %s62, 1
      %p66 = scmp.eq.s32.totalorder %s14, 1
      %p67 = scmp.ne.s32.totalorder %s62, %s64
      %p68 = scmp.eq.s32.totalorder %s14, 0
      %p69 = por %p67, %p68
      %p70 = scmp.ne.s32.totalorder %s62, %s64
      %p71 = scmp.eq.s32.totalorder %s19, 1
      %p72 = por %p70, %p71
      %p73 = scmp.ne.s32.totalorder %s64, %s65
      %p74 = scmp.eq.s32.totalorder %s19, 0
      %p75 = por %p73, %p74
      %p76 = scmp.ne.s32.totalorder %s64, %s65
      %p77 = scmp.eq.s32.totalorder %s20, 1
      %p78 = por %p76, %p77
      %p80 = scmp.ne.s32.totalorder %s65, %s79
      %p81 = scmp.eq.s32.totalorder %s20, 0
      %p82 = por %p80, %p81
      %s84 = sadd.s32 %s83, 1
      %p87 = scmp.eq.s32.totalorder %s14, 1
      %p88 = scmp.ne.s32.totalorder %s83, %s85
      %p89 = scmp.eq.s32.totalorder %s14, 0
      %p90 = por %p88, %p89
      %p91 = scmp.ne.s32.totalorder %s83, %s85
      %p92 = scmp.eq.s32.totalorder %s19, 1
      %p93 = por %p91, %p92
      %p94 = scmp.ne.s32.totalorder %s85, %s86
      %p95 = scmp.eq.s32.totalorder %s19, 0
      %p96 = por %p94, %p95
      %p97 = scmp.ne.s32.totalorder %s85, %s86
      %p98 = scmp.eq.s32.totalorder %s20, 1
      %p99 = por %p97, %p98
      %p101 = scmp.ne.s32.totalorder %s86, %s100
      %p102 = scmp.eq.s32.totalorder %s20, 0
      %p103 = por %p101, %p102
      %s104 = ssub.s32 %s21, %s33
      %p105 = scmp.eq.s32.totalorder %s104, 0
      %s107 = sadd.s32 %s106, 1
      %s108 = scalar_select %p105, %s106, %s107
      %p111 = pneg %p105
      %p112 = scmp.eq.s32.totalorder %s14, 1
      %p113 = por %p111, %p112
      %p114 = scmp.ne.s32.totalorder %s106, %s109
      %p115 = scmp.eq.s32.totalorder %s14, 0
      %p116 = por %p114, %p115
      %p117 = scmp.ne.s32.totalorder %s106, %s109
      %p118 = scmp.eq.s32.totalorder %s19, 1
      %p119 = por %p117, %p118
      %p120 = scmp.ne.s32.totalorder %s109, %s110
      %p121 = scmp.eq.s32.totalorder %s19, 0
      %p122 = por %p120, %p121
      %p123 = scmp.ne.s32.totalorder %s109, %s110
      %p124 = scmp.eq.s32.totalorder %s20, 1
      %p125 = por %p123, %p124
      %p127 = scmp.ne.s32.totalorder %s110, %s126
      %p128 = scmp.eq.s32.totalorder %s20, 0
      %p129 = por %p127, %p128
      %p130 = scmp.le.s32.totalorder 1, %s14
      %p131 = scmp.lt.s32.totalorder %s14, 3
      %p132 = pnand %p130, %p131
      %p133 = pneg %p132
      // Predicated region
      $region9: #{tpu_custom_call.1} parent=5 // pred_check
        _
      $region10: #{tpu_custom_call.1} parent=5 // pred_check_branch
        %135 = sbr.rel (%p132) target = $region12
      $region11: #{tpu_custom_call.1} parent=5 // pred_region
        %s136 = ssub.s32 %s14, 1
        // Predicated region
        $region13: #{tpu_custom_call.1} parent=11 // pred_check
          %p137 = pneg %p75
        $region14: #{tpu_custom_call.1} parent=11 // pred_check_branch
          %139 = sbr.rel (%p137) target = $region16
        $region15: #{tpu_custom_call.1} parent=11 // pred_region
          %s141 = ssub.s32 2048, 2048
          %142 = vsyncadd [#allocation6], %s141
          %s143 = sshll.u32 [#allocation5], 4
          %s144 = int_to_ptr.vmem [resolvable:$true] %s143
          %149 = dma.hbm_to_vmem [thread:$0]  %s1, 2048, %s144, [#allocation6], 64, 64, 4
        $region16: #{tpu_custom_call.1} parent=11 // pred_fallthru
          _
        // Predicated region
        $region17: #{tpu_custom_call.1} parent=11 // pred_check
          %p150 = pneg %p96
        $region18: #{tpu_custom_call.1} parent=11 // pred_check_branch
          %152 = sbr.rel (%p150) target = $region20
        $region19: #{tpu_custom_call.1} parent=11 // pred_region
          _
        $region20: #{tpu_custom_call.1} parent=11 // pred_fallthru
          _
      $region12: #{tpu_custom_call.1} parent=5 // pred_fallthru
        _
      %p153 = scmp.lt.s32.totalorder %s14, 2
      // Predicated region
      $region21: #{tpu_custom_call.1} parent=5 // pred_check
        %p154 = pneg %p153
      $region22: #{tpu_custom_call.1} parent=5 // pred_check_branch
        %156 = sbr.rel (%p154) target = $region24
      $region23: #{tpu_custom_call.1} parent=5 // pred_region
        // Predicated region
        $region25: #{tpu_custom_call.1} parent=23 // pred_check
          %p157 = pneg %p48
        $region26: #{tpu_custom_call.1} parent=23 // pred_check_branch
          %159 = sbr.rel (%p157) target = $region28
        $region27: #{tpu_custom_call.1} parent=23 // pred_region
          %s160 = sand.u32 %s38, 1
          %s161 = scalar_lea.sflag [#allocation3], %s160
          %s162 = sand.u32 %s38, 1
          %s163 = smul.addr %s162, 8
          %s164 = scalar_lea.vmem [#allocation2], %s163
          %s166 = ssub.s32 128, 128
          %167 = vsyncadd %s161, %s166
          %s168 = smul.addr %s21, 2
          %s169 = sadd.s32 %s22, %s168
          %s170 = smul.addr %s169, 128
          %s171 = scalar_lea.hbm %s0, %s170
          %s173 = sshll.u32 %s164, 4
          %s174 = int_to_ptr.vmem [resolvable:$true] %s173
          %176 = dma.hbm_to_vmem [thread:$0]  %s171, 128, %s174, %s161
        $region28: #{tpu_custom_call.1} parent=23 // pred_fallthru
          _
      $region24: #{tpu_custom_call.1} parent=5 // pred_fallthru
        _
      %p177 = scmp.le.s32.totalorder 1, %s14
      %p178 = scmp.lt.s32.totalorder %s14, 3
      %p179 = pnand %p177, %p178
      %p180 = pneg %p179
      // Predicated region
      $region29: #{tpu_custom_call.1} parent=5 // pred_check
        _
      $region30: #{tpu_custom_call.1} parent=5 // pred_check_branch
        %182 = sbr.rel (%p179) target = $region32
      $region31: #{tpu_custom_call.1} parent=5 // pred_region
        %s183 = ssub.s32 %s14, 1
        %s184 = sand.u32 %s41, 1
        %s185 = scalar_lea.sflag [#allocation3], %s184
        %s186 = sand.u32 %s41, 1
        %s187 = smul.addr %s186, 8
        %s188 = scalar_lea.vmem [#allocation2], %s187
        // Predicated region
        $region33: #{tpu_custom_call.1} parent=31 // pred_check
          %p189 = pneg %p54
        $region34: #{tpu_custom_call.1} parent=31 // pred_check_branch
          %191 = sbr.rel (%p189) target = $region36
        $region35: #{tpu_custom_call.1} parent=31 // pred_region
          %192 = dma.done %s185, 128
        $region36: #{tpu_custom_call.1} parent=31 // pred_fallthru
          _
        // Predicated region
        $region37: #{tpu_custom_call.1} parent=31 // pred_check
          %p193 = pneg %p75
        $region38: #{tpu_custom_call.1} parent=31 // pred_check_branch
          %195 = sbr.rel (%p193) target = $region40
        $region39: #{tpu_custom_call.1} parent=31 // pred_region
          %196 = dma.done [#allocation6], 2048
        $region40: #{tpu_custom_call.1} parent=31 // pred_fallthru
          _
        %s197 = sand.u32 %s41, 1
        %s198 = scalar_lea.sflag [#allocation3], %s197
        %s199 = sand.u32 %s41, 1
        %s200 = smul.addr %s199, 8
        %s201 = scalar_lea.vmem [#allocation2], %s200
        %p202 = pneg %p54
        %p203 = pneg %p51
        %p204 = pneg %p75
        %p205 = pneg %p72
        %p206 = pneg %p96
        %p207 = pneg %p93
        %p208 = pneg %p122
        %p209 = pneg %p119
        %p211 = scmp.eq.s32.totalorder %s24, 0
        // Predicated region
        $region41: #{tpu_custom_call.1} parent=31 // pred_check
          %p212 = pneg %p211
        $region42: #{tpu_custom_call.1} parent=31 // pred_check_branch
          %214 = sbr.rel (%p212) target = $region44
        $region43: #{tpu_custom_call.1} parent=31 // pred_region
          %v215 = vld [vmem:[%s2] sm:$0x1]
          %v217 = vlaneseq
          %v218 = vshrl.u32 %v217, 7
          %v219 = vsub.s32 0, %v218
          %v220 = vrot.slane %v215, %v219
          %222 = vst [vmem:[#allocation7] sm:$0xff] %v220
        $region44: #{tpu_custom_call.1} parent=31 // pred_fallthru
          _
        %v223 = vld [vmem:[%s188] sm:$0xff]
        %v224 = vpack.c.bf16 %v223, %v223
        %s225 = smul.u32 %s24, 128
        %s226 = sshra.s32 %s225, 3
        %s227 = sand.u32 %s225, 7
        %s228 = smul.addr %s226, 4
        %s229 = scalar_lea.vmem [#allocation5], %s228
        %v230 = vld [vmem:[%s229] sm:$0xf]
        %v231 = vld [vmem:[%s229 + $0x4] sm:$0xf]
        %v232 = vld [vmem:[%s229 + $0x8] sm:$0xf]
        %v233 = vld [vmem:[%s229 + $0xc] sm:$0xf]
        %v234 = vld [vmem:[%s229 + $0x10] sm:$0xf]
        %v235 = vld [vmem:[%s229 + $0x14] sm:$0xf]
        %v236 = vld [vmem:[%s229 + $0x18] sm:$0xf]
        %v237 = vld [vmem:[%s229 + $0x1c] sm:$0xf]
        %v238 = vld [vmem:[%s229 + $0x20] sm:$0xf]
        %v239 = vld [vmem:[%s229 + $0x24] sm:$0xf]
        %v240 = vld [vmem:[%s229 + $0x28] sm:$0xf]
        %v241 = vld [vmem:[%s229 + $0x2c] sm:$0xf]
        %v242 = vld [vmem:[%s229 + $0x30] sm:$0xf]
        %v243 = vld [vmem:[%s229 + $0x34] sm:$0xf]
        %v244 = vld [vmem:[%s229 + $0x38] sm:$0xf]
        %v245 = vld [vmem:[%s229 + $0x3c] sm:$0xf]
        %v246 = vld [vmem:[#allocation7] sm:$0xff]
        %v263 = vunpack.c.l.b16 %v230
        %v264 = vunpack.c.l.b16 %v231
        %v265 = vunpack.c.l.b16 %v232
        %v266 = vunpack.c.l.b16 %v233
        %v267 = vunpack.c.l.b16 %v234
        %v268 = vunpack.c.l.b16 %v235
        %v269 = vunpack.c.l.b16 %v236
        %v270 = vunpack.c.l.b16 %v237
        %v271 = vunpack.c.l.b16 %v238
        %v272 = vunpack.c.l.b16 %v239
        %v273 = vunpack.c.l.b16 %v240
        %v274 = vunpack.c.l.b16 %v241
        %v275 = vunpack.c.l.b16 %v242
        %v276 = vunpack.c.l.b16 %v243
        %v277 = vunpack.c.l.b16 %v244
        %v278 = vunpack.c.l.b16 %v245
        %v279 = vpack.c.b16 %v264, %v263
        %v280 = vpack.c.b16 %v266, %v265
        %v281 = vpack.c.b16 %v268, %v267
        %v282 = vpack.c.b16 %v270, %v269
        %v283 = vpack.c.b16 %v272, %v271
        %v284 = vpack.c.b16 %v274, %v273
        %v285 = vpack.c.b16 %v276, %v275
        %v286 = vpack.c.b16 %v278, %v277
        %295 = vmatprep.subr.bf16.mxu0 0
        %296 = vmatpush1.bf16.msra.mxu0 %v286
        %297 = vmatprep.subr.bf16.mxu0 0
        %298 = vmatpush1.bf16.msra.mxu0 %v285
        %299 = vmatprep.subr.bf16.mxu0 0
        %300 = vmatpush1.bf16.msra.mxu0 %v284
        %301 = vmatprep.subr.bf16.mxu0 0
        %302 = vmatpush1.bf16.msra.mxu0 %v283
        %303 = vmatprep.subr.bf16.mxu0 0
        %304 = vmatpush1.bf16.msra.mxu0 %v282
        %305 = vmatprep.subr.bf16.mxu0 0
        %306 = vmatpush1.bf16.msra.mxu0 %v281
        %307 = vmatprep.subr.bf16.mxu0 0
        %308 = vmatpush1.bf16.msra.mxu0 %v280
        %309 = vmatprep.subr.bf16.mxu0 0
        %310 = vmatpush1.bf16.msra.mxu0 %v279
        %311 = vmatprep.subr.bf16.mxu0 0
        %312 = vmatpush2.bf16.msra.mxu0 0
        %313 = vmatprep.subr.bf16.mxu0 0
        %314 = vmatpush2.bf16.msra.mxu0 0
        %315 = vmatprep.subr.bf16.mxu0 0
        %316 = vmatpush2.bf16.msra.mxu0 0
        %317 = vmatprep.subr.bf16.mxu0 0
        %318 = vmatpush2.bf16.msra.mxu0 0
        %319 = vmatprep.subr.bf16.mxu0 0
        %320 = vmatpush2.bf16.msra.mxu0 0
        %321 = vmatprep.subr.bf16.mxu0 0
        %322 = vmatpush2.bf16.msra.mxu0 0
        %323 = vmatprep.subr.bf16.mxu0 0
        %324 = vmatpush2.bf16.msra.mxu0 0
        %325 = vmatprep.subr.bf16.mxu0 0
        %326 = vmatpush2.bf16.msra.mxu0 0
        %327 = vmatprep.mubr.bf16.mxu0 0
        %328 = vmatmul.mubr.bf16.gmra.mxu0 %v224
        %v329 = vpop.f32.mrf.mxu0
        %v330 = vadd.f32 0.0, %v329
        %v331 = vpop.f32.mrf.mxu0
        %v332 = vpop.f32.mrf.mxu0
        %v333 = vpop.f32.mrf.mxu0
        %334 = vdwg.mxu0
        %v335 = vadd.f32 %v246, %v330
        %336 = vst [vmem:[#allocation7] sm:$0xff] %v335
        // Predicated region
        $region45: #{tpu_custom_call.1} parent=31 // pred_check
          %p337 = pneg %p119
        $region46: #{tpu_custom_call.1} parent=31 // pred_check_branch
          %339 = sbr.rel (%p337) target = $region48
        $region47: #{tpu_custom_call.1} parent=31 // pred_region
          %s341 = ssub.s32 128, 128
          %342 = vsyncadd [#allocation4], %s341
          %s343 = smul.addr %s23, 128
          %s344 = scalar_lea.hbm %s3, %s343
          %s346 = sshll.u32 [#allocation7], 4
          %s347 = int_to_ptr.vmem [resolvable:$true] %s346
          %349 = dma.vmem_to_hbm [thread:$0]  %s347, 128, %s344, [#allocation4]
        $region48: #{tpu_custom_call.1} parent=31 // pred_fallthru
          _
        // Predicated region
        $region49: #{tpu_custom_call.1} parent=31 // pred_check
          %p350 = pneg %p119
        $region50: #{tpu_custom_call.1} parent=31 // pred_check_branch
          %352 = sbr.rel (%p350) target = $region52
        $region51: #{tpu_custom_call.1} parent=31 // pred_region
          %353 = dma.done [#allocation4], 128
        $region52: #{tpu_custom_call.1} parent=31 // pred_fallthru
          _
      $region32: #{tpu_custom_call.1} parent=5 // pred_fallthru
        _
      %p354 = scmp.le.s32.totalorder 2, %s14
      // Predicated region
      $region53: #{tpu_custom_call.1} parent=5 // pred_check
        %p355 = pneg %p354
      $region54: #{tpu_custom_call.1} parent=5 // pred_check_branch
        %357 = sbr.rel (%p355) target = $region56
      $region55: #{tpu_custom_call.1} parent=5 // pred_region
        %s358 = ssub.s32 %s14, 2
      $region56: #{tpu_custom_call.1} parent=5 // pred_fallthru
        _
    $region6: #{tpu_custom_call.1} parent=1 // loop_footer
      %s18 = sadd.s32 1, %s14
    $region7: #{tpu_custom_call.1} parent=1 // loop_footer_branch
      %13 = sbr.rel target = $region3
    $region8: #{tpu_custom_call.1} parent=1 // loop_exit
      _
    %359 = vsyncpa [#allocation3], 1
    %s360 = scalar_lea.sflag [#allocation3], 1
    %361 = vsyncpa %s360, 1
    %362 = vsyncpa [#allocation6], 1
    %363 = vsyncpa [#allocation4], 1
    %s364 = scalar_lea.sflag [#allocation4], 1
    %365 = vsyncpa %s364, 1

</llo_original>
